<compile_context>
chip_gen: v7x
topology: tpu7x:2x2x1
jax: 0.10.0
libtpu: 0.0.40
codegen_flags: <defaults>
</compile_context>

<pallas_src>
import jax
import jax.numpy as jnp
from jax import lax
from jax.experimental import pallas as pl
from jax.experimental.pallas import tpu as pltpu
import numpy as np

_EPS = 1e-5


def _bn_relu_fused(acc, gamma, beta):
    """One-pass BN stats + fused scale/shift + ReLU.

    acc: (M, C) f32 (stats over M). gamma/beta: (1, C).
    """
    m = acc.shape[0]
    s = jnp.sum(acc, axis=0, keepdims=True)
    ss = jnp.sum(acc * acc, axis=0, keepdims=True)
    mu = s * (1.0 / m)
    var = jnp.maximum(ss * (1.0 / m) - mu * mu, 0.0)   # E[x^2] - mean^2, clamped
    scale = gamma * lax.rsqrt(var + _EPS)              # (1, C)
    shift = beta - mu * scale                          # (1, C)
    return jnp.maximum(acc * scale + shift, 0.0)       # one mul + one add / elem


def _encoding_block_kernel(xpad_ref, w1_ref, w2_ref, pc_ref, o_ref):
    N, Lp2, Cin = xpad_ref.shape
    L = Lp2 - 2
    _, Lo, Cout = o_ref.shape

    xp = xpad_ref[...]                    # (N, L+2, Cin)
    pc = pc_ref[...]                      # (4, Cout): gamma1, beta1, gamma2, beta2

    # ---- Conv1d(Cin->Cout, k=3, s=1, p=1): single im2col matmul over all taps ----
    x_taps = jnp.concatenate(
        [xp[:, 0:L, :], xp[:, 1:L + 1, :], xp[:, 2:L + 2, :]], axis=-1)     # (N, L, 3*Cin)
    acc1 = jnp.dot(x_taps.reshape(N * L, 3 * Cin), w1_ref[...],
                   preferred_element_type=jnp.float32)                      # (N*L, Cout)

    # ---- BN1 (training mode) + ReLU (conv bias cancelled by mean subtraction) ----
    h = _bn_relu_fused(acc1, pc[0:1, :], pc[1:2, :])                        # (N*L, Cout)

    # ---- Conv1d(Cout->Cout, k=3, s=2, p=1): deinterleave even/odd rows so each
    #      tap is a contiguous slice (no strided ref reads), then one im2col dot ----
    h4 = h.reshape(N, Lo, 2, Cout)
    h_even = h4[:, :, 0, :]                                                 # rows 2j
    h_odd = h4[:, :, 1, :]                                                  # rows 2j+1
    zero_row = jnp.zeros((N, 1, Cout), jnp.float32)
    h_prev = jnp.concatenate([zero_row, h_odd[:, :Lo - 1, :]], axis=1)      # rows 2j-1

    h_taps = jnp.concatenate([h_prev, h_even, h_odd], axis=-1)              # (N, Lo, 3*Cout)
    acc2 = jnp.dot(h_taps.reshape(N * Lo, 3 * Cout), w2_ref[...],
                   preferred_element_type=jnp.float32)                      # (N*Lo, Cout)

    # ---- BN2 + ReLU, written straight to the output (no o_ref round-trip) ----
    y = _bn_relu_fused(acc2, pc[2:3, :], pc[3:4, :])
    o_ref[...] = y.reshape(N, Lo, Cout).astype(o_ref.dtype)


def encoding_block(x_ncl, params):
    """x_ncl: (N, Cin, L) float32 (PyTorch Conv1d layout). Returns (N, Cout, L//2)."""
    (w1, b1, g1, bb1, w2, b2, g2, bb2) = params
    del b1, b2  # exactly cancelled by training-mode BN mean subtraction
    N, Cin, L = x_ncl.shape
    assert L % 2 == 0, "even sequence length assumed (stride-2 output = L//2)"
    Cout = w1.shape[2]
    Lo = L // 2

    # glue: NCL -> NLC + conv1 zero padding (plain JAX, single cheap pass)
    # TODO(synk): fold the layout change / padding into the kernel for a fully
    # fused version (and use a lane-dense (C, L) layout when Cout << 128).
    x_nlc = jnp.transpose(x_ncl, (0, 2, 1)).astype(jnp.float32)
    x_pad = jnp.pad(x_nlc, ((0, 0), (1, 1), (0, 0)))

    # weights flattened to im2col layout (tap-major rows); BN affine packed.
    w1f = w1.astype(jnp.float32).reshape(3 * Cin, Cout)
    w2f = w2.astype(jnp.float32).reshape(3 * Cout, Cout)
    pc = jnp.stack([g1, bb1, g2, bb2]).astype(jnp.float32)          # (4, Cout)

    def full(shape):
        return pl.BlockSpec(shape, lambda i, _n=len(shape): (0,) * _n)

    # VMEM budget: double-buffered in/out + weights + in-kernel temporaries.
    f32 = 4
    est = f32 * (2 * (N * (L + 2) * Cin + N * Lo * Cout)
                 + 3 * Cin * Cout + 3 * Cout * Cout + 4 * Cout
                 + 2 * (N * L * (3 * Cin + 2 * Cout) + N * Lo * 5 * Cout))
    vmem_limit = int(min(64 << 20, max(32 << 20, 2 * est)))

    out = pl.pallas_call(
        _encoding_block_kernel,
        out_shape=jax.ShapeDtypeStruct((N, Lo, Cout), jnp.float32),
        grid=(1,),
        in_specs=[
            full((N, L + 2, Cin)),
            full((3 * Cin, Cout)),
            full((3 * Cout, Cout)),
            full((4, Cout)),
        ],
        out_specs=full((N, Lo, Cout)),
        compiler_params=pltpu.CompilerParams(
            dimension_semantics=("arbitrary",),
            vmem_limit_bytes=vmem_limit),
    )(x_pad, w1f, w2f, pc)

    return jnp.transpose(out, (0, 2, 1))  # back to PyTorch NCL


def reference(x_ncl, params):
    """Pure-JAX reference (NCL layout, training-mode BN, biases included)."""
    w1, b1, g1, bb1, w2, b2, g2, bb2 = params
    dn = ('NCH', 'OIH', 'NCH')

    def bn_relu(y, g, b):
        mu = y.mean(axis=(0, 2), keepdims=True)
        var = ((y - mu) ** 2).mean(axis=(0, 2), keepdims=True)
        y = (y - mu) * lax.rsqrt(var + _EPS) * g[None, :, None] + b[None, :, None]
        return jnp.maximum(y, 0.0)

    wt1 = jnp.transpose(w1, (2, 1, 0))  # (K,Cin,Cout) -> (Cout,Cin,K)
    y = lax.conv_general_dilated(x_ncl, wt1, (1,), ((1, 1),),
                                 dimension_numbers=dn,
                                 precision=lax.Precision.HIGHEST)
    y = bn_relu(y + b1[None, :, None], g1, bb1)
    wt2 = jnp.transpose(w2, (2, 1, 0))
    y = lax.conv_general_dilated(y, wt2, (2,), ((1, 1),),
                                 dimension_numbers=dn,
                                 precision=lax.Precision.HIGHEST)
    return bn_relu(y + b2[None, :, None], g2, bb2)


if __name__ == "__main__":
    N, Cin, Cout, L = 2, 4, 8, 16
    key = jax.random.PRNGKey(0)
    ks = jax.random.split(key, 9)

    # deterministic synthetic parameters (kernel weight layout: (K, Cin, Cout))
    w1 = 0.3 * jax.random.normal(ks[0], (3, Cin, Cout), jnp.float32)
    b1 = 0.1 * jax.random.normal(ks[1], (Cout,), jnp.float32)
    g1 = 1.0 + 0.1 * jax.random.normal(ks[2], (Cout,), jnp.float32)
    bb1 = 0.1 * jax.random.normal(ks[3], (Cout,), jnp.float32)
    w2 = 0.2 * jax.random.normal(ks[4], (3, Cout, Cout), jnp.float32)
    b2 = 0.1 * jax.random.normal(ks[5], (Cout,), jnp.float32)
    g2 = 1.0 + 0.1 * jax.random.normal(ks[6], (Cout,), jnp.float32)
    bb2 = 0.1 * jax.random.normal(ks[7], (Cout,), jnp.float32)
    params = (w1, b1, g1, bb1, w2, b2, g2, bb2)

    x = jax.random.normal(ks[8], (N, Cin, L), jnp.float32)

    out = jax.block_until_ready(encoding_block(x, params))
    ref = jax.block_until_ready(reference(x, params))

    assert out.shape == (N, Cout, L // 2), out.shape
    np.testing.assert_allclose(np.asarray(out), np.asarray(ref), rtol=1e-3, atol=1e-3)
    print("KERNEL_OK")
</pallas_src>

<mosaic_0001>
module attributes {stable_mosaic.version = 11 : i64} {
  func.func @_encoding_block_kernel(%arg0: i32, %arg1: memref<2x18x4xf32, #tpu.memory_space<vmem>>, %arg2: memref<12x8xf32, #tpu.memory_space<vmem>>, %arg3: memref<24x8xf32, #tpu.memory_space<vmem>>, %arg4: memref<4x8xf32, #tpu.memory_space<vmem>>, %arg5: memref<2x8x8xf32, #tpu.memory_space<vmem>>) attributes {dimension_semantics = [#tpu.dimension_semantics<arbitrary>], iteration_bounds = array<i64: 1>, scalar_prefetch = 0 : i64, scratch_operands = 0 : i64, tpu.core_type = #tpu.core_type<tc>, window_params = [{pipeline_mode = #tpu.pipeline_mode<synchronous>, transform_indices = @transform_0, window_bounds = array<i64: 2, 18, 4>}, {pipeline_mode = #tpu.pipeline_mode<synchronous>, transform_indices = @transform_1, window_bounds = array<i64: 12, 8>}, {pipeline_mode = #tpu.pipeline_mode<synchronous>, transform_indices = @transform_2, window_bounds = array<i64: 24, 8>}, {pipeline_mode = #tpu.pipeline_mode<synchronous>, transform_indices = @transform_3, window_bounds = array<i64: 4, 8>}, {pipeline_mode = #tpu.pipeline_mode<synchronous>, transform_indices = @transform_4, window_bounds = array<i64: 2, 8, 8>}]} {
    %c0 = arith.constant 0 : index
    %c0_0 = arith.constant 0 : index
    %c0_1 = arith.constant 0 : index
    %0 = vector.load %arg1[%c0, %c0_0, %c0_1] : memref<2x18x4xf32, #tpu.memory_space<vmem>>, vector<2x18x4xf32>
    %c0_2 = arith.constant 0 : index
    %c0_3 = arith.constant 0 : index
    %1 = vector.load %arg4[%c0_2, %c0_3] : memref<4x8xf32, #tpu.memory_space<vmem>>, vector<4x8xf32>
    %2 = vector.extract_strided_slice %0 {offsets = [0, 0, 0], sizes = [2, 16, 4], strides = [1, 1, 1]} : vector<2x18x4xf32> to vector<2x16x4xf32>
    %3 = vector.extract_strided_slice %0 {offsets = [0, 1, 0], sizes = [2, 16, 4], strides = [1, 1, 1]} : vector<2x18x4xf32> to vector<2x16x4xf32>
    %4 = vector.extract_strided_slice %0 {offsets = [0, 2, 0], sizes = [2, 16, 4], strides = [1, 1, 1]} : vector<2x18x4xf32> to vector<2x16x4xf32>
    %5 = tpu.concatenate %2, %3, %4 in 2 : vector<2x16x4xf32>, vector<2x16x4xf32>, vector<2x16x4xf32> -> vector<2x16x12xf32>
    %6 = vector.shape_cast %5 : vector<2x16x12xf32> to vector<32x12xf32>
    %c0_4 = arith.constant 0 : index
    %c0_5 = arith.constant 0 : index
    %7 = vector.load %arg2[%c0_4, %c0_5] : memref<12x8xf32, #tpu.memory_space<vmem>>, vector<12x8xf32>
    %cst = arith.constant dense<0.000000e+00> : vector<32x8xf32>
    %8 = tpu.matmul %6, %7, %cst {dimension_numbers = #tpu.dot_dimension_numbers<[1], [0], [0], [1], [0, 0, 1, 1], [], []>} : vector<32x12xf32>, vector<12x8xf32>, vector<32x8xf32> -> vector<32x8xf32>
    %9 = vector.extract_strided_slice %1 {offsets = [0, 0], sizes = [1, 8], strides = [1, 1]} : vector<4x8xf32> to vector<1x8xf32>
    %10 = vector.extract_strided_slice %1 {offsets = [1, 0], sizes = [1, 8], strides = [1, 1]} : vector<4x8xf32> to vector<1x8xf32>
    %cst_6 = arith.constant dense<0.000000e+00> : vector<8xf32>
    %11 = vector.multi_reduction <add>, %8, %cst_6 [0] : vector<32x8xf32> to vector<8xf32>
    %12 = vector.shape_cast %11 : vector<8xf32> to vector<1x8xf32>
    %13 = arith.mulf %8, %8 : vector<32x8xf32>
    %cst_7 = arith.constant dense<0.000000e+00> : vector<8xf32>
    %14 = vector.multi_reduction <add>, %13, %cst_7 [0] : vector<32x8xf32> to vector<8xf32>
    %15 = vector.shape_cast %14 : vector<8xf32> to vector<1x8xf32>
    %cst_8 = arith.constant 3.125000e-02 : f32
    %16 = vector.broadcast %cst_8 : f32 to vector<1x8xf32>
    %17 = arith.mulf %12, %16 : vector<1x8xf32>
    %cst_9 = arith.constant 3.125000e-02 : f32
    %18 = vector.broadcast %cst_9 : f32 to vector<1x8xf32>
    %19 = arith.mulf %15, %18 : vector<1x8xf32>
    %20 = arith.mulf %17, %17 : vector<1x8xf32>
    %21 = arith.subf %19, %20 : vector<1x8xf32>
    %cst_10 = arith.constant 0.000000e+00 : f32
    %22 = vector.broadcast %cst_10 : f32 to vector<1x8xf32>
    %23 = arith.maximumf %21, %22 : vector<1x8xf32>
    %cst_11 = arith.constant 9.99999974E-6 : f32
    %24 = vector.broadcast %cst_11 : f32 to vector<1x8xf32>
    %25 = arith.addf %23, %24 : vector<1x8xf32>
    %26 = math.rsqrt %25 : vector<1x8xf32>
    %27 = arith.mulf %9, %26 : vector<1x8xf32>
    %28 = arith.mulf %17, %27 : vector<1x8xf32>
    %29 = arith.subf %10, %28 : vector<1x8xf32>
    %30 = vector.broadcast %27 : vector<1x8xf32> to vector<32x8xf32>
    %31 = arith.mulf %8, %30 : vector<32x8xf32>
    %32 = vector.broadcast %29 : vector<1x8xf32> to vector<32x8xf32>
    %33 = arith.addf %31, %32 : vector<32x8xf32>
    %cst_12 = arith.constant 0.000000e+00 : f32
    %34 = vector.broadcast %cst_12 : f32 to vector<32x8xf32>
    %35 = arith.maximumf %33, %34 : vector<32x8xf32>
    %36 = vector.shape_cast %35 : vector<32x8xf32> to vector<2x8x2x8xf32>
    %37 = vector.extract_strided_slice %36 {offsets = [0, 0, 0, 0], sizes = [2, 8, 1, 8], strides = [1, 1, 1, 1]} : vector<2x8x2x8xf32> to vector<2x8x1x8xf32>
    %38 = vector.shape_cast %37 : vector<2x8x1x8xf32> to vector<2x8x8xf32>
    %39 = vector.extract_strided_slice %36 {offsets = [0, 0, 1, 0], sizes = [2, 8, 1, 8], strides = [1, 1, 1, 1]} : vector<2x8x2x8xf32> to vector<2x8x1x8xf32>
    %40 = vector.shape_cast %39 : vector<2x8x1x8xf32> to vector<2x8x8xf32>
    %cst_13 = arith.constant 0.000000e+00 : f32
    %41 = vector.broadcast %cst_13 : f32 to vector<2x1x8xf32>
    %42 = vector.extract_strided_slice %40 {offsets = [0, 0, 0], sizes = [2, 7, 8], strides = [1, 1, 1]} : vector<2x8x8xf32> to vector<2x7x8xf32>
    %43 = tpu.concatenate %41, %42 in 1 : vector<2x1x8xf32>, vector<2x7x8xf32> -> vector<2x8x8xf32>
    %44 = tpu.concatenate %43, %38, %40 in 2 : vector<2x8x8xf32>, vector<2x8x8xf32>, vector<2x8x8xf32> -> vector<2x8x24xf32>
    %45 = vector.shape_cast %44 : vector<2x8x24xf32> to vector<16x24xf32>
    %c0_14 = arith.constant 0 : index
    %c0_15 = arith.constant 0 : index
    %46 = vector.load %arg3[%c0_14, %c0_15] : memref<24x8xf32, #tpu.memory_space<vmem>>, vector<24x8xf32>
    %cst_16 = arith.constant dense<0.000000e+00> : vector<16x8xf32>
    %47 = tpu.matmul %45, %46, %cst_16 {dimension_numbers = #tpu.dot_dimension_numbers<[1], [0], [0], [1], [0, 0, 1, 1], [], []>} : vector<16x24xf32>, vector<24x8xf32>, vector<16x8xf32> -> vector<16x8xf32>
    %48 = vector.extract_strided_slice %1 {offsets = [2, 0], sizes = [1, 8], strides = [1, 1]} : vector<4x8xf32> to vector<1x8xf32>
    %49 = vector.extract_strided_slice %1 {offsets = [3, 0], sizes = [1, 8], strides = [1, 1]} : vector<4x8xf32> to vector<1x8xf32>
    %cst_17 = arith.constant dense<0.000000e+00> : vector<8xf32>
    %50 = vector.multi_reduction <add>, %47, %cst_17 [0] : vector<16x8xf32> to vector<8xf32>
    %51 = vector.shape_cast %50 : vector<8xf32> to vector<1x8xf32>
    %52 = arith.mulf %47, %47 : vector<16x8xf32>
    %cst_18 = arith.constant dense<0.000000e+00> : vector<8xf32>
    %53 = vector.multi_reduction <add>, %52, %cst_18 [0] : vector<16x8xf32> to vector<8xf32>
    %54 = vector.shape_cast %53 : vector<8xf32> to vector<1x8xf32>
    %cst_19 = arith.constant 6.250000e-02 : f32
    %55 = vector.broadcast %cst_19 : f32 to vector<1x8xf32>
    %56 = arith.mulf %51, %55 : vector<1x8xf32>
    %cst_20 = arith.constant 6.250000e-02 : f32
    %57 = vector.broadcast %cst_20 : f32 to vector<1x8xf32>
    %58 = arith.mulf %54, %57 : vector<1x8xf32>
    %59 = arith.mulf %56, %56 : vector<1x8xf32>
    %60 = arith.subf %58, %59 : vector<1x8xf32>
    %cst_21 = arith.constant 0.000000e+00 : f32
    %61 = vector.broadcast %cst_21 : f32 to vector<1x8xf32>
    %62 = arith.maximumf %60, %61 : vector<1x8xf32>
    %cst_22 = arith.constant 9.99999974E-6 : f32
    %63 = vector.broadcast %cst_22 : f32 to vector<1x8xf32>
    %64 = arith.addf %62, %63 : vector<1x8xf32>
    %65 = math.rsqrt %64 : vector<1x8xf32>
    %66 = arith.mulf %48, %65 : vector<1x8xf32>
    %67 = arith.mulf %56, %66 : vector<1x8xf32>
    %68 = arith.subf %49, %67 : vector<1x8xf32>
    %69 = vector.broadcast %66 : vector<1x8xf32> to vector<16x8xf32>
    %70 = arith.mulf %47, %69 : vector<16x8xf32>
    %71 = vector.broadcast %68 : vector<1x8xf32> to vector<16x8xf32>
    %72 = arith.addf %70, %71 : vector<16x8xf32>
    %cst_23 = arith.constant 0.000000e+00 : f32
    %73 = vector.broadcast %cst_23 : f32 to vector<16x8xf32>
    %74 = arith.maximumf %72, %73 : vector<16x8xf32>
    %75 = vector.shape_cast %74 : vector<16x8xf32> to vector<2x8x8xf32>
    %c0_24 = arith.constant 0 : index
    %c0_25 = arith.constant 0 : index
    %c0_26 = arith.constant 0 : index
    %76 = vector.load %arg5[%c0_24, %c0_25, %c0_26] : memref<2x8x8xf32, #tpu.memory_space<vmem>>, vector<2x8x8xf32>
    tpu.vector_store %arg5[%c0_24, %c0_25, %c0_26], %75 {strides = array<i32>} : memref<2x8x8xf32, #tpu.memory_space<vmem>>, vector<2x8x8xf32>,
    return
  }
  func.func @transform_0(%arg0: i32) -> (i32, i32, i32) {
    %c0_i32 = arith.constant 0 : i32
    %c0_i32_0 = arith.constant 0 : i32
    %c0_i32_1 = arith.constant 0 : i32
    %c0_i32_2 = arith.constant 0 : i32
    return %c0_i32, %c0_i32_0, %c0_i32_1 : i32, i32, i32
  }
  func.func @transform_1(%arg0: i32) -> (i32, i32) {
    %c0_i32 = arith.constant 0 : i32
    %c0_i32_0 = arith.constant 0 : i32
    %c0_i32_1 = arith.constant 0 : i32
    return %c0_i32, %c0_i32_0 : i32, i32
  }
  func.func @transform_2(%arg0: i32) -> (i32, i32) {
    %c0_i32 = arith.constant 0 : i32
    %c0_i32_0 = arith.constant 0 : i32
    %c0_i32_1 = arith.constant 0 : i32
    return %c0_i32, %c0_i32_0 : i32, i32
  }
  func.func @transform_3(%arg0: i32) -> (i32, i32) {
    %c0_i32 = arith.constant 0 : i32
    %c0_i32_0 = arith.constant 0 : i32
    %c0_i32_1 = arith.constant 0 : i32
    return %c0_i32, %c0_i32_0 : i32, i32
  }
  func.func @transform_4(%arg0: i32) -> (i32, i32, i32) {
    %c0_i32 = arith.constant 0 : i32
    %c0_i32_0 = arith.constant 0 : i32
    %c0_i32_1 = arith.constant 0 : i32
    %c0_i32_2 = arith.constant 0 : i32
    return %c0_i32, %c0_i32_0, %c0_i32_1 : i32, i32, i32
  }
}

</mosaic_0001>

<llo_original>
// kernel: tpu_custom_call.1
$region0: #{tpu_custom_call.1}
  #allocation0 [shape = 'u32[]', space=smem, size = 0x4, offset = 0x4, fixed_abs, tag = 'smem constant byte address 0x4 - core index']
  #allocation1 [shape = 'u32[144,128]{1,0:T(1,128)}', space=vmem, size = 0x12000, scoped, tag = 'internal scratch']
  %s0 = inlined_call_operand.vmem [shape: f32[2,18,4], index: 0, kind: input, shape index: {}]
  %s1 = inlined_call_operand.vmem [shape: f32[12,8], index: 1, kind: input, shape index: {}]
  %s2 = inlined_call_operand.vmem [shape: f32[24,8], index: 2, kind: input, shape index: {}]
  %s3 = inlined_call_operand.vmem [shape: f32[4,8], index: 3, kind: input, shape index: {}]
  %s4 = inlined_call_operand.hbm [shape: f32[2,8,8], index: 4, kind: output, shape index: {}]
  %s5 = sld [smem:[#allocation0]]
  $region26: #{tpu_custom_call.1} parent=0
    _
  %s7 = ssub.s32 1, %s5
  %s8 = scalar_select 0, %s7, %s5
  $region1: #{tpu_custom_call.1} parent=0
    #allocation2 [shape = 'u8[8192]{0}', space=vmem, size = 0x2000, scoped, tag = 'output window, operand 0, single buffered']
    #allocation3 [shape = 's32[1]{0}', space=sflag, size = 0x4, scoped, tag = 'scoped memory for tpu_custom_call.1']
    %9 = vsyncpa [#allocation3], 0
    // Predicated region
    $region2: #{tpu_custom_call.1} parent=1 // pred_check
      _
    $region3: #{tpu_custom_call.1} parent=1 // pred_check_branch
      %11 = sbr.rel (0) target = $region5
    $region4: #{tpu_custom_call.1} parent=1 // pred_region
      _
    $region5: #{tpu_custom_call.1} parent=1 // pred_fallthru
      _
    // Predicated region
    $region6: #{tpu_custom_call.1} parent=1 // pred_check
      _
    $region7: #{tpu_custom_call.1} parent=1 // pred_check_branch
      %13 = sbr.rel (0) target = $region9
    $region8: #{tpu_custom_call.1} parent=1 // pred_region
      _
    $region9: #{tpu_custom_call.1} parent=1 // pred_fallthru
      _
    // Predicated region
    $region10: #{tpu_custom_call.1} parent=1 // pred_check
      _
    $region11: #{tpu_custom_call.1} parent=1 // pred_check_branch
      %15 = sbr.rel (0) target = $region13
    $region12: #{tpu_custom_call.1} parent=1 // pred_region
      _
    $region13: #{tpu_custom_call.1} parent=1 // pred_fallthru
      _
    // Predicated region
    $region14: #{tpu_custom_call.1} parent=1 // pred_check
      _
    $region15: #{tpu_custom_call.1} parent=1 // pred_check_branch
      %17 = sbr.rel (0) target = $region17
    $region16: #{tpu_custom_call.1} parent=1 // pred_region
      _
    $region17: #{tpu_custom_call.1} parent=1 // pred_fallthru
      _
    %v18 = vld [vmem:[%s0] sm:$0xff]
    %v19 = vld [vmem:[%s0 + $0x8] sm:$0xff]
    %v20 = vld [vmem:[%s0 + $0x10] sm:$0x3]
    %v21 = vld [vmem:[%s0 + $0x18] sm:$0xff]
    %v22 = vld [vmem:[%s0 + $0x20] sm:$0xff]
    %v23 = vld [vmem:[%s0 + $0x28] sm:$0x3]
    %v24 = vld [vmem:[%s3] sm:$0xf]
    %vm31 = vcmask 1046528
    %v32 = vrot.slane %v18, 1
    %v33 = vrot.slane %v19, 1
    %v34 = vsel %vm31, %v32, %v33
    %v35 = vrot.slane %v20, 1
    %v36 = vsel %vm31, %v33, %v35
    %v37 = vrot.slane %v21, 1
    %v38 = vrot.slane %v22, 1
    %v39 = vsel %vm31, %v37, %v38
    %v40 = vrot.slane %v23, 1
    %v41 = vsel %vm31, %v38, %v40
    %42 = vrot.lane.b32.xlu0 %v34, 4
    %v43 = vpop.permute.xlu0 %42
    %44 = vrot.lane.b32.xlu0 %v36, 4
    %v45 = vpop.permute.xlu0 %44
    %46 = vrot.lane.b32.xlu0 %v39, 4
    %v47 = vpop.permute.xlu0 %46
    %48 = vrot.lane.b32.xlu0 %v41, 4
    %v49 = vpop.permute.xlu0 %48
    %vm54 = vcmask 1045504
    %v55 = vrot.slane %v18, 2
    %v56 = vrot.slane %v19, 2
    %v57 = vsel %vm54, %v55, %v56
    %v58 = vrot.slane %v20, 2
    %v59 = vsel %vm54, %v56, %v58
    %v60 = vrot.slane %v21, 2
    %v61 = vrot.slane %v22, 2
    %v62 = vsel %vm54, %v60, %v61
    %v63 = vrot.slane %v23, 2
    %v64 = vsel %vm54, %v61, %v63
    %65 = vrot.lane.b32.xlu0 %v57, 8
    %v66 = vpop.permute.xlu0 %65
    %67 = vrot.lane.b32.xlu0 %v59, 8
    %v68 = vpop.permute.xlu0 %67
    %69 = vrot.lane.b32.xlu0 %v62, 8
    %v70 = vpop.permute.xlu0 %69
    %71 = vrot.lane.b32.xlu0 %v64, 8
    %v72 = vpop.permute.xlu0 %71
    %vm77 = vcmask 31744
    %v78 = vsel %vm77, %v18, %v43
    %v79 = vsel %vm77, %v19, %v45
    %v80 = vsel %vm77, %v21, %v47
    %v81 = vsel %vm77, %v22, %v49
    %vm82 = vcmask 64512
    %v83 = vsel %vm82, %v78, %v66
    %v84 = vsel %vm82, %v79, %v68
    %v85 = vsel %vm82, %v80, %v70
    %v86 = vsel %vm82, %v81, %v72
    %v87 = vld [vmem:[%s1] sm:$0xff]
    %v88 = vld [vmem:[%s1 + $0x8] sm:$0xf]
    %vm89 = vcmask 97280
    %v91 = vsel %vm89, %v83, 0
    %v94 = vsel %vm89, %v84, 0
    %v97 = vsel %vm89, %v85, 0
    %v100 = vsel %vm89, %v86, 0
    %vm102 = vcmask 1043456
    %v104 = vsel %vm102, %v88, 0
    %106 = vmatprep.subr.mxu0 0.0
    %107 = vmatpush1.msra.mxu0 %v87
    %108 = vmatprep.subr.mxu0 0.0
    %109 = vmatpush1.msra.mxu0 %v104
    %110 = vmatprep.subr.mxu0 0.0
    %111 = vmatpush1.msra.mxu0 0.0
    %112 = vmatprep.subr.mxu0 0.0
    %113 = vmatpush1.msra.mxu0 0.0
    %114 = vmatprep.subr.mxu0 0.0
    %115 = vmatpush1.msra.mxu0 0.0
    %116 = vmatprep.subr.mxu0 0.0
    %117 = vmatpush1.msra.mxu0 0.0
    %118 = vmatprep.subr.mxu0 0.0
    %119 = vmatpush1.msra.mxu0 0.0
    %120 = vmatprep.subr.mxu0 0.0
    %121 = vmatpush1.msra.mxu0 0.0
    %122 = vmatprep.subr.mxu0 0.0
    %123 = vmatpush1.msra.mxu0 0.0
    %124 = vmatprep.subr.mxu0 0.0
    %125 = vmatpush1.msra.mxu0 0.0
    %126 = vmatprep.subr.mxu0 0.0
    %127 = vmatpush1.msra.mxu0 0.0
    %128 = vmatprep.subr.mxu0 0.0
    %129 = vmatpush1.msra.mxu0 0.0
    %130 = vmatprep.subr.mxu0 0.0
    %131 = vmatpush1.msra.mxu0 0.0
    %132 = vmatprep.subr.mxu0 0.0
    %133 = vmatpush1.msra.mxu0 0.0
    %134 = vmatprep.subr.mxu0 0.0
    %135 = vmatpush1.msra.mxu0 0.0
    %136 = vmatprep.subr.mxu0 0.0
    %137 = vmatpush1.msra.mxu0 0.0
    %138 = vmatprep.subr.mxu0 0.0
    %139 = vmatpush1.msra.mxu0 0.0
    %140 = vmatprep.subr.mxu0 0.0
    %141 = vmatpush1.msra.mxu0 0.0
    %142 = vmatprep.subr.mxu0 0.0
    %143 = vmatpush1.msra.mxu0 0.0
    %144 = vmatprep.subr.mxu0 0.0
    %145 = vmatpush1.msra.mxu0 0.0
    %146 = vmatprep.subr.mxu0 0.0
    %147 = vmatpush1.msra.mxu0 0.0
    %148 = vmatprep.subr.mxu0 0.0
    %149 = vmatpush1.msra.mxu0 0.0
    %150 = vmatprep.subr.mxu0 0.0
    %151 = vmatpush1.msra.mxu0 0.0
    %152 = vmatprep.subr.mxu0 0.0
    %153 = vmatpush1.msra.mxu0 0.0
    %154 = vmatprep.subr.mxu0 0.0
    %155 = vmatpush1.msra.mxu0 0.0
    %156 = vmatprep.subr.mxu0 0.0
    %157 = vmatpush1.msra.mxu0 0.0
    %158 = vmatprep.subr.mxu0 0.0
    %159 = vmatpush1.msra.mxu0 0.0
    %160 = vmatprep.subr.mxu0 0.0
    %161 = vmatpush1.msra.mxu0 0.0
    %162 = vmatprep.subr.mxu0 0.0
    %163 = vmatpush1.msra.mxu0 0.0
    %164 = vmatprep.subr.mxu0 0.0
    %165 = vmatpush1.msra.mxu0 0.0
    %166 = vmatprep.subr.mxu0 0.0
    %167 = vmatpush1.msra.mxu0 0.0
    %168 = vmatprep.subr.mxu0 0.0
    %169 = vmatpush1.msra.mxu0 0.0
    %170 = vmatprep.mubr.f32.mxu0 0.0
    %171 = vmatmul.mubr.f32.gmra.mrb[0].mxu0 %v91
    %v172 = vpop.f32.mrb[0].mxu0
    %v173 = vadd.f32 0.0, %v172
    %v174 = vpop.f32.mrb[0].mxu0
    %175 = vmatprep.mubr.f32.mxu0 0.0
    %176 = vmatmul.mubr.f32.gmra.mrb[0].mxu0 %v94
    %v177 = vpop.f32.mrb[0].mxu0
    %v178 = vadd.f32 0.0, %v177
    %v179 = vpop.f32.mrb[0].mxu0
    %180 = vmatprep.mubr.f32.mxu0 0.0
    %181 = vmatmul.mubr.f32.gmra.mrb[0].mxu0 %v97
    %v182 = vpop.f32.mrb[0].mxu0
    %v183 = vadd.f32 0.0, %v182
    %v184 = vpop.f32.mrb[0].mxu0
    %185 = vmatprep.mubr.f32.mxu0 0.0
    %186 = vmatmul.mubr.f32.gmra.mrb[0].mxu0 %v100
    %v187 = vpop.f32.mrb[0].mxu0
    %v188 = vadd.f32 0.0, %v187
    %v189 = vpop.f32.mrb[0].mxu0
    %190 = vdwg.mxu0
    %v191 = vsel %vm82, %v173, 0.0
    %v192 = vsel %vm82, %v178, 0.0
    %v193 = vadd.f32 %v191, %v192
    %v194 = vsel %vm82, %v183, 0.0
    %v195 = vadd.f32 %v193, %v194
    %v196 = vsel %vm82, %v188, 0.0
    %v197 = vadd.f32 %v195, %v196
    %v198 = vrot.slane %v197, 4
    %v199 = vadd.f32 %v197, %v198
    %v200 = vrot.slane %v199, 2
    %v201 = vadd.f32 %v199, %v200
    %v202 = vrot.slane %v201, 1
    %v203 = vadd.f32 %v201, %v202
    %v204 = vmul.f32 %v173, %v173
    %v205 = vmul.f32 %v178, %v178
    %v206 = vmul.f32 %v183, %v183
    %v207 = vmul.f32 %v188, %v188
    %v208 = vsel %vm82, %v204, 0.0
    %v209 = vsel %vm82, %v205, 0.0
    %v210 = vadd.f32 %v208, %v209
    %v211 = vsel %vm82, %v206, 0.0
    %v212 = vadd.f32 %v210, %v211
    %v213 = vsel %vm82, %v207, 0.0
    %v214 = vadd.f32 %v212, %v213
    %v215 = vrot.slane %v214, 4
    %v216 = vadd.f32 %v214, %v215
    %v217 = vrot.slane %v216, 2
    %v218 = vadd.f32 %v216, %v217
    %v219 = vrot.slane %v218, 1
    %v220 = vadd.f32 %v218, %v219
    %v221 = vmul.f32 %v203, 0.03125
    %v222 = vmul.f32 %v220, 0.03125
    %v223 = vmul.f32 %v221, %v221
    %v224 = vsub.f32 %v222, %v223
    %v225 = vmax.f32 %v224, 0.0
    %v226 = vadd.f32 %v225, 1e-05
    %v227 = vrsqrt.pop %v226
    %v228 = vmul.f32 %v24, %v227
    %v229 = vmul.f32 %v221, %v228
    %v231 = vrot.slane %v229, 7
    %v233 = vsub.f32 %v24, %v231
    %v234 = vlaneseq
    %v235 = vshrl.u32 %v234, 7
    %v236 = vsub.s32 0, %v235
    %v237 = vrot.slane %v228, %v236
    %v238 = vmul.f32 %v173, %v237
    %v239 = vmul.f32 %v178, %v237
    %v240 = vmul.f32 %v183, %v237
    %v241 = vmul.f32 %v188, %v237
    %v242 = vlaneseq
    %v243 = vshrl.u32 %v242, 7
    %v244 = vsub.s32 1, %v243
    %v245 = vrot.slane %v233, %v244
    %v246 = vadd.f32 %v238, %v245
    %v247 = vadd.f32 %v239, %v245
    %v248 = vadd.f32 %v240, %v245
    %v249 = vadd.f32 %v241, %v245
    %v250 = vmax.f32 %v246, 0.0
    %v251 = vmax.f32 %v247, 0.0
    %v252 = vmax.f32 %v248, 0.0
    %v253 = vmax.f32 %v249, 0.0
    %v258 = vcombine.high %v250, %v250
    %v260 = vunpack.c.l.s4 1983009808
    %v261 = vunpack.c.0.s8 %v260
    %v262 = vlaneseq
    %v263 = vshrl.u32 %v262, 7
    %v264 = vsub.s32 %v261, %v263
    %v265 = vrot.slane %v250, %v264
    %v267 = vunpack.c.l.s4 1983009808
    %v268 = vunpack.c.0.s8 %v267
    %v269 = vlaneseq
    %v270 = vshrl.u32 %v269, 7
    %v271 = vsub.s32 %v268, %v270
    %v272 = vrot.slane %v258, %v271
    %v273 = vcombine.high %v265, %v265
    %v274 = vcombine.high %v272, %v272
    %v275 = vcombine.high %v251, %v251
    %v277 = vunpack.c.l.s4 1983009808
    %v278 = vunpack.c.0.s8 %v277
    %v279 = vlaneseq
    %v280 = vshrl.u32 %v279, 7
    %v281 = vsub.s32 %v278, %v280
    %v282 = vrot.slane %v251, %v281
    %v284 = vunpack.c.l.s4 1983009808
    %v285 = vunpack.c.0.s8 %v284
    %v286 = vlaneseq
    %v287 = vshrl.u32 %v286, 7
    %v288 = vsub.s32 %v285, %v287
    %v289 = vrot.slane %v275, %v288
    %v290 = vcombine.high %v282, %v282
    %v291 = vcombine.high %v289, %v289
    %v292 = vcombine.high %v252, %v252
    %v294 = vunpack.c.l.s4 1983009808
    %v295 = vunpack.c.0.s8 %v294
    %v296 = vlaneseq
    %v297 = vshrl.u32 %v296, 7
    %v298 = vsub.s32 %v295, %v297
    %v299 = vrot.slane %v252, %v298
    %v301 = vunpack.c.l.s4 1983009808
    %v302 = vunpack.c.0.s8 %v301
    %v303 = vlaneseq
    %v304 = vshrl.u32 %v303, 7
    %v305 = vsub.s32 %v302, %v304
    %v306 = vrot.slane %v292, %v305
    %v307 = vcombine.high %v299, %v299
    %v308 = vcombine.high %v306, %v306
    %v309 = vcombine.high %v253, %v253
    %v311 = vunpack.c.l.s4 1983009808
    %v312 = vunpack.c.0.s8 %v311
    %v313 = vlaneseq
    %v314 = vshrl.u32 %v313, 7
    %v315 = vsub.s32 %v312, %v314
    %v316 = vrot.slane %v253, %v315
    %v318 = vunpack.c.l.s4 1983009808
    %v319 = vunpack.c.0.s8 %v318
    %v320 = vlaneseq
    %v321 = vshrl.u32 %v320, 7
    %v322 = vsub.s32 %v319, %v321
    %v323 = vrot.slane %v309, %v322
    %v324 = vcombine.high %v316, %v316
    %v325 = vcombine.high %v323, %v323
    %v326 = vlaneseq
    %v327 = vshrl.u32 %v326, 7
    %v328 = vsub.s32 1, %v327
    %v329 = vrot.slane %v265, %v328
    %v330 = vlaneseq
    %v331 = vshrl.u32 %v330, 7
    %v332 = vsub.s32 1, %v331
    %v333 = vrot.slane %v273, %v332
    %v334 = vlaneseq
    %v335 = vshrl.u32 %v334, 7
    %v336 = vsub.s32 1, %v335
    %v337 = vrot.slane %v272, %v336
    %v338 = vlaneseq
    %v339 = vshrl.u32 %v338, 7
    %v340 = vsub.s32 1, %v339
    %v341 = vrot.slane %v274, %v340
    %v342 = vlaneseq
    %v343 = vshrl.u32 %v342, 7
    %v344 = vsub.s32 1, %v343
    %v345 = vrot.slane %v282, %v344
    %v346 = vlaneseq
    %v347 = vshrl.u32 %v346, 7
    %v348 = vsub.s32 1, %v347
    %v349 = vrot.slane %v290, %v348
    %v350 = vlaneseq
    %v351 = vshrl.u32 %v350, 7
    %v352 = vsub.s32 1, %v351
    %v353 = vrot.slane %v289, %v352
    %v354 = vlaneseq
    %v355 = vshrl.u32 %v354, 7
    %v356 = vsub.s32 1, %v355
    %v357 = vrot.slane %v299, %v356
    %v358 = vlaneseq
    %v359 = vshrl.u32 %v358, 7
    %v360 = vsub.s32 1, %v359
    %v361 = vrot.slane %v307, %v360
    %v362 = vlaneseq
    %v363 = vshrl.u32 %v362, 7
    %v364 = vsub.s32 1, %v363
    %v365 = vrot.slane %v306, %v364
    %v366 = vlaneseq
    %v367 = vshrl.u32 %v366, 7
    %v368 = vsub.s32 1, %v367
    %v369 = vrot.slane %v308, %v368
    %v370 = vlaneseq
    %v371 = vshrl.u32 %v370, 7
    %v372 = vsub.s32 1, %v371
    %v373 = vrot.slane %v316, %v372
    %v374 = vlaneseq
    %v375 = vshrl.u32 %v374, 7
    %v376 = vsub.s32 1, %v375
    %v377 = vrot.slane %v324, %v376
    %v378 = vlaneseq
    %v379 = vshrl.u32 %v378, 7
    %v380 = vsub.s32 1, %v379
    %v381 = vrot.slane %v323, %v380
    %vm382 = vcmask 1042434
    %v383 = vsel %vm382, %v333, %v329
    %vm384 = vcmask 1043459
    %v385 = vsel %vm384, %v337, %v383
    %vm386 = vcmask 1044484
    %v387 = vsel %vm386, %v341, %v385
    %vm388 = vcmask 1045509
    %v389 = vsel %vm388, %v345, %v387
    %vm390 = vcmask 1046534
    %v391 = vsel %vm390, %v349, %v389
    %vm392 = vcmask 1047559
    %v393 = vsel %vm392, %v353, %v391
    %v394 = vsel %vm382, %v361, %v357
    %v395 = vsel %vm384, %v365, %v394
    %v396 = vsel %vm386, %v369, %v395
    %v397 = vsel %vm388, %v373, %v396
    %v398 = vsel %vm390, %v377, %v397
    %v399 = vsel %vm392, %v381, %v398
    %vm402 = vcmask 1040384
    %v403 = vsel %vm402, 0.0, %v393
    %v404 = vsel %vm402, 0.0, %v399
    %v405 = vlaneseq
    %v406 = vshrl.u32 %v405, 7
    %v407 = vsub.s32 0, %v406
    %v408 = vrot.slane %v265, %v407
    %v409 = vlaneseq
    %v410 = vshrl.u32 %v409, 7
    %v411 = vsub.s32 0, %v410
    %v412 = vrot.slane %v273, %v411
    %v413 = vlaneseq
    %v414 = vshrl.u32 %v413, 7
    %v415 = vsub.s32 0, %v414
    %v416 = vrot.slane %v272, %v415
    %v417 = vlaneseq
    %v418 = vshrl.u32 %v417, 7
    %v419 = vsub.s32 0, %v418
    %v420 = vrot.slane %v274, %v419
    %v421 = vlaneseq
    %v422 = vshrl.u32 %v421, 7
    %v423 = vsub.s32 0, %v422
    %v424 = vrot.slane %v282, %v423
    %v425 = vlaneseq
    %v426 = vshrl.u32 %v425, 7
    %v427 = vsub.s32 0, %v426
    %v428 = vrot.slane %v290, %v427
    %v429 = vlaneseq
    %v430 = vshrl.u32 %v429, 7
    %v431 = vsub.s32 0, %v430
    %v432 = vrot.slane %v289, %v431
    %v433 = vlaneseq
    %v434 = vshrl.u32 %v433, 7
    %v435 = vsub.s32 0, %v434
    %v436 = vrot.slane %v291, %v435
    %v437 = vlaneseq
    %v438 = vshrl.u32 %v437, 7
    %v439 = vsub.s32 0, %v438
    %v440 = vrot.slane %v299, %v439
    %v441 = vlaneseq
    %v442 = vshrl.u32 %v441, 7
    %v443 = vsub.s32 0, %v442
    %v444 = vrot.slane %v307, %v443
    %v445 = vlaneseq
    %v446 = vshrl.u32 %v445, 7
    %v447 = vsub.s32 0, %v446
    %v448 = vrot.slane %v306, %v447
    %v449 = vlaneseq
    %v450 = vshrl.u32 %v449, 7
    %v451 = vsub.s32 0, %v450
    %v452 = vrot.slane %v308, %v451
    %v453 = vlaneseq
    %v454 = vshrl.u32 %v453, 7
    %v455 = vsub.s32 0, %v454
    %v456 = vrot.slane %v316, %v455
    %v457 = vlaneseq
    %v458 = vshrl.u32 %v457, 7
    %v459 = vsub.s32 0, %v458
    %v460 = vrot.slane %v324, %v459
    %v461 = vlaneseq
    %v462 = vshrl.u32 %v461, 7
    %v463 = vsub.s32 0, %v462
    %v464 = vrot.slane %v323, %v463
    %v465 = vlaneseq
    %v466 = vshrl.u32 %v465, 7
    %v467 = vsub.s32 0, %v466
    %v468 = vrot.slane %v325, %v467
    %vm469 = vcmask 1041409
    %v470 = vsel %vm469, %v412, %v408
    %v471 = vsel %vm382, %v416, %v470
    %v472 = vsel %vm384, %v420, %v471
    %v473 = vsel %vm386, %v424, %v472
    %v474 = vsel %vm388, %v428, %v473
    %v475 = vsel %vm390, %v432, %v474
    %v476 = vsel %vm392, %v436, %v475
    %v477 = vsel %vm469, %v444, %v440
    %v478 = vsel %vm382, %v448, %v477
    %v479 = vsel %vm384, %v452, %v478
    %v480 = vsel %vm386, %v456, %v479
    %v481 = vsel %vm388, %v460, %v480
    %v482 = vsel %vm390, %v464, %v481
    %v483 = vsel %vm392, %v468, %v482
    %484 = vrot.lane.b32.xlu0 %v476, 8
    %v485 = vpop.permute.xlu0 %484
    %486 = vrot.lane.b32.xlu0 %v483, 8
    %v487 = vpop.permute.xlu0 %486
    %v490 = vlaneseq
    %v491 = vshrl.u32 %v490, 7
    %v492 = vsub.s32 1, %v491
    %v493 = vrot.slane %v291, %v492
    %v494 = vlaneseq
    %v495 = vshrl.u32 %v494, 7
    %v496 = vsub.s32 1, %v495
    %v497 = vrot.slane %v325, %v496
    %v498 = vsel %vm469, %v333, %v329
    %v499 = vsel %vm382, %v337, %v498
    %v500 = vsel %vm384, %v341, %v499
    %v501 = vsel %vm386, %v345, %v500
    %v502 = vsel %vm388, %v349, %v501
    %v503 = vsel %vm390, %v353, %v502
    %v504 = vsel %vm392, %v493, %v503
    %v505 = vsel %vm469, %v361, %v357
    %v506 = vsel %vm382, %v365, %v505
    %v507 = vsel %vm384, %v369, %v506
    %v508 = vsel %vm386, %v373, %v507
    %v509 = vsel %vm388, %v377, %v508
    %v510 = vsel %vm390, %v381, %v509
    %v511 = vsel %vm392, %v497, %v510
    %512 = vrot.lane.b32.xlu0 %v504, 16
    %v513 = vpop.permute.xlu0 %512
    %514 = vrot.lane.b32.xlu0 %v511, 16
    %v515 = vpop.permute.xlu0 %514
    %v518 = vsel %vm82, %v403, %v485
    %v519 = vsel %vm82, %v404, %v487
    %vm520 = vcmask 130048
    %v521 = vsel %vm520, %v518, %v513
    %v522 = vsel %vm520, %v519, %v515
    %v523 = vld [vmem:[%s2] sm:$0xff]
    %v524 = vld [vmem:[%s2 + $0x8] sm:$0xff]
    %v525 = vld [vmem:[%s2 + $0x10] sm:$0xff]
    %vm526 = vcmask 195584
    %v528 = vsel %vm526, %v521, 0
    %v531 = vsel %vm526, %v522, 0
    %533 = vmatprep.subr.mxu0 0.0
    %534 = vmatpush1.msra.mxu0 %v523
    %535 = vmatprep.subr.mxu0 0.0
    %536 = vmatpush1.msra.mxu0 %v524
    %537 = vmatprep.subr.mxu0 0.0
    %538 = vmatpush1.msra.mxu0 %v525
    %539 = vmatprep.subr.mxu0 0.0
    %540 = vmatpush1.msra.mxu0 0.0
    %541 = vmatprep.subr.mxu0 0.0
    %542 = vmatpush1.msra.mxu0 0.0
    %543 = vmatprep.subr.mxu0 0.0
    %544 = vmatpush1.msra.mxu0 0.0
    %545 = vmatprep.subr.mxu0 0.0
    %546 = vmatpush1.msra.mxu0 0.0
    %547 = vmatprep.subr.mxu0 0.0
    %548 = vmatpush1.msra.mxu0 0.0
    %549 = vmatprep.subr.mxu0 0.0
    %550 = vmatpush1.msra.mxu0 0.0
    %551 = vmatprep.subr.mxu0 0.0
    %552 = vmatpush1.msra.mxu0 0.0
    %553 = vmatprep.subr.mxu0 0.0
    %554 = vmatpush1.msra.mxu0 0.0
    %555 = vmatprep.subr.mxu0 0.0
    %556 = vmatpush1.msra.mxu0 0.0
    %557 = vmatprep.subr.mxu0 0.0
    %558 = vmatpush1.msra.mxu0 0.0
    %559 = vmatprep.subr.mxu0 0.0
    %560 = vmatpush1.msra.mxu0 0.0
    %561 = vmatprep.subr.mxu0 0.0
    %562 = vmatpush1.msra.mxu0 0.0
    %563 = vmatprep.subr.mxu0 0.0
    %564 = vmatpush1.msra.mxu0 0.0
    %565 = vmatprep.subr.mxu0 0.0
    %566 = vmatpush1.msra.mxu0 0.0
    %567 = vmatprep.subr.mxu0 0.0
    %568 = vmatpush1.msra.mxu0 0.0
    %569 = vmatprep.subr.mxu0 0.0
    %570 = vmatpush1.msra.mxu0 0.0
    %571 = vmatprep.subr.mxu0 0.0
    %572 = vmatpush1.msra.mxu0 0.0
    %573 = vmatprep.subr.mxu0 0.0
    %574 = vmatpush1.msra.mxu0 0.0
    %575 = vmatprep.subr.mxu0 0.0
    %576 = vmatpush1.msra.mxu0 0.0
    %577 = vmatprep.subr.mxu0 0.0
    %578 = vmatpush1.msra.mxu0 0.0
    %579 = vmatprep.subr.mxu0 0.0
    %580 = vmatpush1.msra.mxu0 0.0
    %581 = vmatprep.subr.mxu0 0.0
    %582 = vmatpush1.msra.mxu0 0.0
    %583 = vmatprep.subr.mxu0 0.0
    %584 = vmatpush1.msra.mxu0 0.0
    %585 = vmatprep.subr.mxu0 0.0
    %586 = vmatpush1.msra.mxu0 0.0
    %587 = vmatprep.subr.mxu0 0.0
    %588 = vmatpush1.msra.mxu0 0.0
    %589 = vmatprep.subr.mxu0 0.0
    %590 = vmatpush1.msra.mxu0 0.0
    %591 = vmatprep.subr.mxu0 0.0
    %592 = vmatpush1.msra.mxu0 0.0
    %593 = vmatprep.subr.mxu0 0.0
    %594 = vmatpush1.msra.mxu0 0.0
    %595 = vmatprep.subr.mxu0 0.0
    %596 = vmatpush1.msra.mxu0 0.0
    %597 = vmatprep.mubr.f32.mxu0 0.0
    %598 = vmatmul.mubr.f32.gmra.mrb[0].mxu0 %v528
    %v599 = vpop.f32.mrb[0].mxu0
    %v600 = vadd.f32 0.0, %v599
    %v601 = vpop.f32.mrb[0].mxu0
    %602 = vmatprep.mubr.f32.mxu0 0.0
    %603 = vmatmul.mubr.f32.gmra.mrb[0].mxu0 %v531
    %v604 = vpop.f32.mrb[0].mxu0
    %v605 = vadd.f32 0.0, %v604
    %v606 = vpop.f32.mrb[0].mxu0
    %607 = vdwg.mxu0
    %v608 = vsel %vm82, %v600, 0.0
    %v609 = vsel %vm82, %v605, 0.0
    %v610 = vadd.f32 %v608, %v609
    %v611 = vrot.slane %v610, 4
    %v612 = vadd.f32 %v610, %v611
    %v613 = vrot.slane %v612, 2
    %v614 = vadd.f32 %v612, %v613
    %v615 = vrot.slane %v614, 1
    %v616 = vadd.f32 %v614, %v615
    %v617 = vmul.f32 %v600, %v600
    %v618 = vmul.f32 %v605, %v605
    %v619 = vsel %vm82, %v617, 0.0
    %v620 = vsel %vm82, %v618, 0.0
    %v621 = vadd.f32 %v619, %v620
    %v622 = vrot.slane %v621, 4
    %v623 = vadd.f32 %v621, %v622
    %v624 = vrot.slane %v623, 2
    %v625 = vadd.f32 %v623, %v624
    %v626 = vrot.slane %v625, 1
    %v627 = vadd.f32 %v625, %v626
    %v628 = vmul.f32 %v616, 0.0625
    %v629 = vmul.f32 %v627, 0.0625
    %v630 = vmul.f32 %v628, %v628
    %v631 = vsub.f32 %v629, %v630
    %v632 = vmax.f32 %v631, 0.0
    %v633 = vadd.f32 %v632, 1e-05
    %v634 = vrsqrt.pop %v633
    %v635 = vmul.f32 %v24, %v634
    %v636 = vmul.f32 %v628, %v635
    %v638 = vrot.slane %v636, 7
    %v640 = vsub.f32 %v24, %v638
    %v641 = vlaneseq
    %v642 = vshrl.u32 %v641, 7
    %v643 = vsub.s32 2, %v642
    %v644 = vrot.slane %v635, %v643
    %v645 = vmul.f32 %v600, %v644
    %v646 = vmul.f32 %v605, %v644
    %v647 = vlaneseq
    %v648 = vshrl.u32 %v647, 7
    %v649 = vsub.s32 3, %v648
    %v650 = vrot.slane %v640, %v649
    %v651 = vadd.f32 %v645, %v650
    %v652 = vadd.f32 %v646, %v650
    %v653 = vmax.f32 %v651, 0.0
    %v654 = vmax.f32 %v652, 0.0
    %655 = vst.msk [vmem:[#allocation2] sm:$0xff] %vm82, %v653
    %656 = vst.msk [vmem:[#allocation2 + $0x8] sm:$0xff] %vm82, %v654
    // Predicated region
    $region18: #{tpu_custom_call.1} parent=1 // pred_check
      _
    $region19: #{tpu_custom_call.1} parent=1 // pred_check_branch
      %658 = sbr.rel (0) target = $region21
    $region20: #{tpu_custom_call.1} parent=1 // pred_region
      %s660 = ssub.s32 256, 256
      %661 = vsyncadd [#allocation3], %s660
      %s662 = sshll.u32 [#allocation2], 4
      %s663 = int_to_ptr.vmem [resolvable:$true] %s662
      %668 = dma.vmem_to_hbm [thread:$0]  %s663, 256, %s4, [#allocation3], 128, 128, 8
    $region21: #{tpu_custom_call.1} parent=1 // pred_fallthru
      _
    // Predicated region
    $region22: #{tpu_custom_call.1} parent=1 // pred_check
      _
    $region23: #{tpu_custom_call.1} parent=1 // pred_check_branch
      %670 = sbr.rel (0) target = $region25
    $region24: #{tpu_custom_call.1} parent=1 // pred_region
      %671 = dma.done [#allocation3], 256
    $region25: #{tpu_custom_call.1} parent=1 // pred_fallthru
      _
    %672 = vsyncpa [#allocation3], 1

</llo_original>
